<compile_context>
chip_gen: v7x
topology: tpu7x:2x2x1
jax: 0.10.0
libtpu: 0.0.40
codegen_flags: <defaults>
</compile_context>

<pallas_src>
import numpy as np
import jax
import jax.numpy as jnp
from jax import lax
from jax.experimental import pallas as pl
from jax.experimental.pallas import tpu as pltpu

_LANES = 128
_SUBLANES = 8
_CHUNK_ROWS = 32          # one int8 (32,128) tile / four f32 (8,128) vregs per step
_MAX_TILE_ROWS = 8192     # ~10 MiB double-buffered (p f32 + t i8), safe on all gens


def _round_up(x: int, m: int) -> int:
    return ((x + m - 1) // m) * m


def _make_focal_loss_kernel(weight0: float, weight1: float, gamma: float,
                            n: int, tile_rows: int, needs_mask: bool):
    """All closure values are Python scalars / bools (trace-time literals)."""
    w0 = float(weight0)
    w1 = float(weight1)
    g = float(gamma)
    n_chunks = tile_rows // _CHUNK_ROWS

    def _term(p, t):
        # Single-log focal term:  log(q) * |1-q|^g * w,  q = t==1 ? p : 1-p.
        pos = t.astype(jnp.int32) == 1
        q = jnp.where(pos, p, 1.0 - p)
        w = jnp.where(pos, w1, w0)
        logq = jnp.log(q)
        if g == 0.0:
            # |x|**0 == 1 exactly (matches Python/NumPy/torch 0**0 == 1).
            return logq * w
        base = jnp.abs(1.0 - q)
        if g.is_integer() and 0.0 < g <= 8.0:
            f = base
            for _ in range(int(g) - 1):
                f = f * base
            return logq * f * w
        # General gamma: one extra log + exp on the EUP.
        return logq * jnp.exp(g * jnp.log(base)) * w

    def kernel(p_ref, t_ref, o_ref):
        # p_ref: (tile_rows, 128) f32, t_ref: (tile_rows, 128) i8,
        # o_ref: (8, 128) f32 partial-sum block for this tile.
        i = pl.program_id(0)

        def make_body(apply_mask):
            def body(c, acc):
                r0 = pl.multiple_of(c * _CHUNK_ROWS, _CHUNK_ROWS)
                p = p_ref[pl.ds(r0, _CHUNK_ROWS), :]
                t = t_ref[pl.ds(r0, _CHUNK_ROWS), :]
                term = _term(p, t)
                if apply_mask:
                    # Zero every element whose flat index >= n (lane pad and
                    # Pallas ragged-edge garbage all live in the last tile).
                    row = lax.broadcasted_iota(jnp.int32, term.shape, 0)
                    lane = lax.broadcasted_iota(jnp.int32, term.shape, 1)
                    flat = (i * tile_rows + r0 + row) * _LANES + lane
                    term = jnp.where(flat < n, term, 0.0)
                part = term.reshape(_CHUNK_ROWS // _SUBLANES, _SUBLANES,
                                    _LANES).sum(axis=0)
                return acc + part
            return body

        def run(apply_mask):
            acc0 = jnp.zeros((_SUBLANES, _LANES), jnp.float32)
            acc = lax.fori_loop(0, n_chunks, make_body(apply_mask), acc0,
                                unroll=2 if n_chunks >= 2 else 1)
            o_ref[...] = acc

        if not needs_mask:
            run(False)
        else:
            last = pl.num_programs(0) - 1

            @pl.when(i != last)
            def _():
                run(False)

            @pl.when(i == last)
            def _():
                run(True)

    return kernel


def focal_loss_pallas(inp, target, weight0=1.0, weight1=1.0, gamma=0.0):
    """inp: (N, 1) or (N,) probabilities in (0,1); target: (N,) of {0,1}."""
    p_flat = jnp.reshape(inp, (-1,))
    if p_flat.dtype != jnp.float32:
        p_flat = p_flat.astype(jnp.float32)
    t_flat = jnp.reshape(target, (-1,))
    if t_flat.dtype != jnp.int8:
        t_flat = t_flat.astype(jnp.int8)   # cheaper HBM operand (1 B/elem)

    n = int(p_flat.shape[0])
    rows = -(-n // _LANES)                 # ceil(n / 128)

    # Pad only the sub-128 tail; zero-copy reshape when n is lane-aligned.
    # Pad values p=0, t=0 give an exactly-zero term even before masking.
    pad = rows * _LANES - n
    if pad:
        p_flat = jnp.pad(p_flat, (0, pad))
        t_flat = jnp.pad(t_flat, (0, pad))
    p2 = p_flat.reshape(rows, _LANES)
    t2 = t_flat.reshape(rows, _LANES)

    # Tile choice: as big as possible (amortize per-step overhead), but split
    # into >= 2 tiles when possible so the parallel grid axis can use both
    # TensorCores on v7x; multiple of 32 rows keeps the int8 (32,128) packing.
    tile_rows = max(_CHUNK_ROWS,
                    min(_MAX_TILE_ROWS, _round_up(-(-rows // 2), _CHUNK_ROWS)))
    num_tiles = -(-rows // tile_rows)
    needs_mask = (num_tiles * tile_rows * _LANES) != n

    kernel = _make_focal_loss_kernel(float(weight0), float(weight1), float(gamma),
                                     n, tile_rows, needs_mask)

    elems = rows * _LANES
    g = float(gamma)
    n_logs = 1 if (g == 0.0 or (g.is_integer() and 0.0 < g <= 8.0)) else 2
    cost = pl.CostEstimate(
        flops=10 * elems,
        transcendentals=n_logs * elems,
        bytes_accessed=5 * elems + num_tiles * _SUBLANES * _LANES * 4,
    )

    partials = pl.pallas_call(
        kernel,
        out_shape=jax.ShapeDtypeStruct((num_tiles * _SUBLANES, _LANES), jnp.float32),
        grid=(num_tiles,),
        in_specs=[
            pl.BlockSpec((tile_rows, _LANES), lambda i: (i, 0)),
            pl.BlockSpec((tile_rows, _LANES), lambda i: (i, 0)),
        ],
        out_specs=pl.BlockSpec((_SUBLANES, _LANES), lambda i: (i, 0)),
        # TODO(synk): if a v7x profile shows exposed DMA between steps, add
        # pipeline_mode=pl.Buffered(3) on the two input BlockSpecs.
        compiler_params=pltpu.CompilerParams(
            dimension_semantics=("parallel",),
            vmem_limit_bytes=32 * 1024 * 1024),
        cost_estimate=cost,
    )(p2, t2)

    # Tiny final reduce + scale (PyTorch: (-loss / N).squeeze(0) -> scalar).
    return -jnp.sum(partials) / jnp.float32(n)


def focal_loss_ref(inp, target, weight0=1.0, weight1=1.0, gamma=0.0):
    p = np.asarray(inp, dtype=np.float64).reshape(-1)
    t = np.asarray(target).reshape(-1)
    loss = 0.0
    for i in range(p.shape[0]):
        if t[i] == 1:
            loss += np.log(p[i]) * abs(1.0 - p[i]) ** gamma * weight1
        else:
            loss += np.log(1.0 - p[i]) * abs(0.0 - p[i]) ** gamma * weight0
    return np.float32(-loss / p.shape[0])


if __name__ == "__main__":
    key = jax.random.PRNGKey(0)

    # Case 1: tiny (N, 1) sigmoid-head output, integer gamma (specialized path).
    kp, kt, key = jax.random.split(key, 3)
    N1 = 8
    inp1 = jax.random.uniform(kp, (N1, 1), dtype=jnp.float32, minval=0.05, maxval=0.95)
    tgt1 = (jax.random.uniform(kt, (N1,)) > 0.5).astype(jnp.int8)
    out1 = jax.block_until_ready(focal_loss_pallas(inp1, tgt1, 0.75, 1.25, 2.0))
    ref1 = focal_loss_ref(np.asarray(inp1), np.asarray(tgt1), 0.75, 1.25, 2.0)
    np.testing.assert_allclose(np.asarray(out1), ref1, rtol=1e-5, atol=1e-6)

    # Case 2: non-multiple-of-128 N with non-integer gamma (general path + tail mask).
    kp, kt = jax.random.split(key)
    N2 = 300
    inp2 = jax.random.uniform(kp, (N2, 1), dtype=jnp.float32, minval=0.05, maxval=0.95)
    tgt2 = (jax.random.uniform(kt, (N2,)) > 0.5).astype(jnp.int8)
    out2 = jax.block_until_ready(focal_loss_pallas(inp2, tgt2, 1.0, 2.0, 1.5))
    ref2 = focal_loss_ref(np.asarray(inp2), np.asarray(tgt2), 1.0, 2.0, 1.5)
    np.testing.assert_allclose(np.asarray(out2), ref2, rtol=1e-5, atol=1e-6)

    print("KERNEL_OK")
</pallas_src>

<mosaic_0001>
module attributes {stable_mosaic.version = 11 : i64} {
  func.func @kernel(%arg0: i32, %arg1: memref<32x128xf32, #tpu.memory_space<vmem>>, %arg2: memref<32x128xi8, #tpu.memory_space<vmem>>, %arg3: memref<8x128xf32, #tpu.memory_space<vmem>>) attributes {dimension_semantics = [#tpu.dimension_semantics<parallel>], iteration_bounds = array<i64: 1>, scalar_prefetch = 0 : i64, scratch_operands = 0 : i64, tpu.core_type = #tpu.core_type<tc>, window_params = [{transform_indices = @transform_0, window_bounds = array<i64: 32, 128>}, {transform_indices = @transform_1, window_bounds = array<i64: 32, 128>}, {transform_indices = @transform_2, window_bounds = array<i64: 8, 128>}]} {
    %c0_i32 = arith.constant 0 : i32
    %0 = arith.cmpi ne, %arg0, %c0_i32 : i32
    %1 = arith.extui %0 : i1 to i32
    %c0_i32_0 = arith.constant 0 : i32
    %2 = arith.cmpi ne, %1, %c0_i32_0 : i32
    scf.if %2 {
      %cst = arith.constant 0.000000e+00 : f32
      %6 = vector.broadcast %cst : f32 to vector<8x128xf32>
      %c0_i32_3 = arith.constant 0 : i32
      %c32_i32 = arith.constant 32 : i32
      %7 = arith.muli %c0_i32_3, %c32_i32 : i32
      %8 = tpu.assume_multiple %7, 32 : i32
      %9 = arith.index_cast %8 : i32 to index
      %c0 = arith.constant 0 : index
      %10 = vector.load %arg1[%9, %c0] : memref<32x128xf32, #tpu.memory_space<vmem>>, vector<32x128xf32>
      %11 = arith.index_cast %8 : i32 to index
      %c0_4 = arith.constant 0 : index
      %12 = vector.load %arg2[%11, %c0_4] : memref<32x128xi8, #tpu.memory_space<vmem>>, vector<32x128xi8>
      %13 = arith.extsi %12 : vector<32x128xi8> to vector<32x128xi32>
      %c1_i32 = arith.constant 1 : i32
      %14 = vector.broadcast %c1_i32 : i32 to vector<32x128xi32>
      %15 = arith.cmpi eq, %13, %14 : vector<32x128xi32>
      %cst_5 = arith.constant 1.000000e+00 : f32
      %16 = vector.broadcast %cst_5 : f32 to vector<32x128xf32>
      %17 = arith.subf %16, %10 : vector<32x128xf32>
      %18 = arith.select %15, %10, %17 : vector<32x128xi1>, vector<32x128xf32>
      %cst_6 = arith.constant 1.250000e+00 : f32
      %cst_7 = arith.constant 7.500000e-01 : f32
      %19 = vector.broadcast %cst_6 : f32 to vector<32x128xf32>
      %20 = vector.broadcast %cst_7 : f32 to vector<32x128xf32>
      %21 = arith.select %15, %19, %20 : vector<32x128xi1>, vector<32x128xf32>
      %22 = math.log %18 : vector<32x128xf32>
      %cst_8 = arith.constant 1.000000e+00 : f32
      %23 = vector.broadcast %cst_8 : f32 to vector<32x128xf32>
      %24 = arith.subf %23, %18 : vector<32x128xf32>
      %25 = math.absf %24 : vector<32x128xf32>
      %26 = arith.mulf %25, %25 : vector<32x128xf32>
      %27 = arith.mulf %22, %26 : vector<32x128xf32>
      %28 = arith.mulf %27, %21 : vector<32x128xf32>
      %29 = vector.shape_cast %28 : vector<32x128xf32> to vector<4x8x128xf32>
      %cst_9 = arith.constant dense<0.000000e+00> : vector<8x128xf32>
      %30 = vector.multi_reduction <add>, %29, %cst_9 [0] : vector<4x8x128xf32> to vector<8x128xf32>
      %31 = arith.addf %6, %30 : vector<8x128xf32>
      %c1_i32_10 = arith.constant 1 : i32
      %c0_11 = arith.constant 0 : index
      %c0_12 = arith.constant 0 : index
      %32 = vector.load %arg3[%c0_11, %c0_12] : memref<8x128xf32, #tpu.memory_space<vmem>>, vector<8x128xf32>
      tpu.vector_store %arg3[%c0_11, %c0_12], %31 {strides = array<i32>} : memref<8x128xf32, #tpu.memory_space<vmem>>, vector<8x128xf32>,
    } else {
    }
    %c0_i32_1 = arith.constant 0 : i32
    %3 = arith.cmpi eq, %arg0, %c0_i32_1 : i32
    %4 = arith.extui %3 : i1 to i32
    %c0_i32_2 = arith.constant 0 : i32
    %5 = arith.cmpi ne, %4, %c0_i32_2 : i32
    scf.if %5 {
      %cst = arith.constant 0.000000e+00 : f32
      %6 = vector.broadcast %cst : f32 to vector<8x128xf32>
      %c0_i32_3 = arith.constant 0 : i32
      %c32_i32 = arith.constant 32 : i32
      %7 = arith.muli %c0_i32_3, %c32_i32 : i32
      %8 = tpu.assume_multiple %7, 32 : i32
      %9 = arith.index_cast %8 : i32 to index
      %c0 = arith.constant 0 : index
      %10 = vector.load %arg1[%9, %c0] : memref<32x128xf32, #tpu.memory_space<vmem>>, vector<32x128xf32>
      %11 = arith.index_cast %8 : i32 to index
      %c0_4 = arith.constant 0 : index
      %12 = vector.load %arg2[%11, %c0_4] : memref<32x128xi8, #tpu.memory_space<vmem>>, vector<32x128xi8>
      %13 = arith.extsi %12 : vector<32x128xi8> to vector<32x128xi32>
      %c1_i32 = arith.constant 1 : i32
      %14 = vector.broadcast %c1_i32 : i32 to vector<32x128xi32>
      %15 = arith.cmpi eq, %13, %14 : vector<32x128xi32>
      %cst_5 = arith.constant 1.000000e+00 : f32
      %16 = vector.broadcast %cst_5 : f32 to vector<32x128xf32>
      %17 = arith.subf %16, %10 : vector<32x128xf32>
      %18 = arith.select %15, %10, %17 : vector<32x128xi1>, vector<32x128xf32>
      %cst_6 = arith.constant 1.250000e+00 : f32
      %cst_7 = arith.constant 7.500000e-01 : f32
      %19 = vector.broadcast %cst_6 : f32 to vector<32x128xf32>
      %20 = vector.broadcast %cst_7 : f32 to vector<32x128xf32>
      %21 = arith.select %15, %19, %20 : vector<32x128xi1>, vector<32x128xf32>
      %22 = math.log %18 : vector<32x128xf32>
      %cst_8 = arith.constant 1.000000e+00 : f32
      %23 = vector.broadcast %cst_8 : f32 to vector<32x128xf32>
      %24 = arith.subf %23, %18 : vector<32x128xf32>
      %25 = math.absf %24 : vector<32x128xf32>
      %26 = arith.mulf %25, %25 : vector<32x128xf32>
      %27 = arith.mulf %22, %26 : vector<32x128xf32>
      %28 = arith.mulf %27, %21 : vector<32x128xf32>
      %29 = tpu.iota {dimensions = array<i32: 0>} : vector<32x128xi32>
      %30 = tpu.iota {dimensions = array<i32: 1>} : vector<32x128xi32>
      %c32_i32_9 = arith.constant 32 : i32
      %31 = arith.muli %arg0, %c32_i32_9 : i32
      %32 = arith.addi %31, %8 : i32
      %33 = vector.broadcast %32 : i32 to vector<32x128xi32>
      %34 = arith.addi %33, %29 : vector<32x128xi32>
      %c128_i32 = arith.constant 128 : i32
      %35 = vector.broadcast %c128_i32 : i32 to vector<32x128xi32>
      %36 = arith.muli %34, %35 : vector<32x128xi32>
      %37 = arith.addi %36, %30 : vector<32x128xi32>
      %c8_i32 = arith.constant 8 : i32
      %38 = vector.broadcast %c8_i32 : i32 to vector<32x128xi32>
      %39 = arith.cmpi slt, %37, %38 : vector<32x128xi32>
      %cst_10 = arith.constant 0.000000e+00 : f32
      %40 = vector.broadcast %cst_10 : f32 to vector<32x128xf32>
      %41 = arith.select %39, %28, %40 : vector<32x128xi1>, vector<32x128xf32>
      %42 = vector.shape_cast %41 : vector<32x128xf32> to vector<4x8x128xf32>
      %cst_11 = arith.constant dense<0.000000e+00> : vector<8x128xf32>
      %43 = vector.multi_reduction <add>, %42, %cst_11 [0] : vector<4x8x128xf32> to vector<8x128xf32>
      %44 = arith.addf %6, %43 : vector<8x128xf32>
      %c1_i32_12 = arith.constant 1 : i32
      %c0_13 = arith.constant 0 : index
      %c0_14 = arith.constant 0 : index
      %45 = vector.load %arg3[%c0_13, %c0_14] : memref<8x128xf32, #tpu.memory_space<vmem>>, vector<8x128xf32>
      tpu.vector_store %arg3[%c0_13, %c0_14], %44 {strides = array<i32>} : memref<8x128xf32, #tpu.memory_space<vmem>>, vector<8x128xf32>,
    } else {
    }
    return
  }
  func.func @transform_0(%arg0: i32) -> (i32, i32) {
    %c0_i32 = arith.constant 0 : i32
    %c0_i32_0 = arith.constant 0 : i32
    return %arg0, %c0_i32 : i32, i32
  }
  func.func @transform_1(%arg0: i32) -> (i32, i32) {
    %c0_i32 = arith.constant 0 : i32
    %c0_i32_0 = arith.constant 0 : i32
    return %arg0, %c0_i32 : i32, i32
  }
  func.func @transform_2(%arg0: i32) -> (i32, i32) {
    %c0_i32 = arith.constant 0 : i32
    %c0_i32_0 = arith.constant 0 : i32
    return %arg0, %c0_i32 : i32, i32
  }
}

</mosaic_0001>

<llo_original>
// kernel: tpu_custom_call.1
$region0: #{tpu_custom_call.1}
  #allocation0 [shape = 'u32[]', space=smem, size = 0x4, offset = 0x4, fixed_abs, tag = 'smem constant byte address 0x4 - core index']
  #allocation1 [shape = 'u32[144,128]{1,0:T(1,128)}', space=vmem, size = 0x12000, scoped, tag = 'internal scratch']
  %s0 = inlined_call_operand.hbm [shape: f32[1,128], index: 0, kind: input, shape index: {}]
  %s1 = inlined_call_operand.vmem [shape: s8[1,128], index: 1, kind: input, shape index: {}]
  %s2 = inlined_call_operand.hbm [shape: f32[8,128], index: 2, kind: output, shape index: {}]
  %s3 = sld [smem:[#allocation0]]
  $region30: #{tpu_custom_call.1} parent=0
    _
  %s5 = ssub.s32 1, %s3
  %s6 = scalar_select 0, %s5, %s3
  $region1: #{tpu_custom_call.1} parent=0
    #allocation2 [shape = 'u8[16384]{0}', space=vmem, size = 0x4000, scoped, tag = 'input window, operand 0, single buffered']
    #allocation3 [shape = 's32[1]{0}', space=sflag, size = 0x4, scoped, tag = 'scoped memory for tpu_custom_call.1']
    #allocation4 [shape = 's32[1]{0}', space=sflag, size = 0x4, scoped, tag = 'scoped memory for tpu_custom_call.1']
    #allocation5 [shape = 'u8[4096]{0}', space=vmem, size = 0x1000, scoped, tag = 'output window, operand 0, single buffered']
    %7 = vsyncpa [#allocation3], 0
    %8 = vsyncpa [#allocation4], 0
    // Predicated region
    $region2: #{tpu_custom_call.1} parent=1 // pred_check
      _
    $region3: #{tpu_custom_call.1} parent=1 // pred_check_branch
      %10 = sbr.rel (0) target = $region5
    $region4: #{tpu_custom_call.1} parent=1 // pred_region
      %s12 = ssub.s32 512, 16
      %13 = vsyncadd [#allocation3], %s12
      %s14 = sshll.u32 [#allocation2], 4
      %s15 = int_to_ptr.vmem [resolvable:$true] %s14
      %20 = dma.hbm_to_vmem [thread:$0]  %s0, 16, %s15, [#allocation3], 16, 16, 1
    $region5: #{tpu_custom_call.1} parent=1 // pred_fallthru
      _
    // Predicated region
    $region6: #{tpu_custom_call.1} parent=1 // pred_check
      _
    $region7: #{tpu_custom_call.1} parent=1 // pred_check_branch
      %22 = sbr.rel (0) target = $region9
    $region8: #{tpu_custom_call.1} parent=1 // pred_region
      _
    $region9: #{tpu_custom_call.1} parent=1 // pred_fallthru
      _
    // Predicated region
    $region10: #{tpu_custom_call.1} parent=1 // pred_check
      _
    $region11: #{tpu_custom_call.1} parent=1 // pred_check_branch
      %24 = sbr.rel (0) target = $region13
    $region12: #{tpu_custom_call.1} parent=1 // pred_region
      %25 = dma.done [#allocation3], 512
    $region13: #{tpu_custom_call.1} parent=1 // pred_fallthru
      _
    %p26 = scmp.ne.s32.totalorder 0, 0
    // Predicated region
    $region14: #{tpu_custom_call.1} parent=1 // pred_check
      %p27 = pneg %p26
    $region15: #{tpu_custom_call.1} parent=1 // pred_check_branch
      %29 = sbr.rel (%p27) target = $region17
    $region16: #{tpu_custom_call.1} parent=1 // pred_region
      %v30 = vld [vmem:[#allocation2] sm:$0xff]
      %v31 = vld [vmem:[#allocation2 + $0x8] sm:$0xff]
      %v32 = vld [vmem:[#allocation2 + $0x10] sm:$0xff]
      %v33 = vld [vmem:[#allocation2 + $0x18] sm:$0xff]
      %v34 = vld [vmem:[%s1] sm:$0x1]
      %v35 = vld [vmem:[%s1 + $0x1] sm:$0x1]
      %v36 = vld [vmem:[%s1 + $0x2] sm:$0x1]
      %v37 = vld [vmem:[%s1 + $0x3] sm:$0x1]
      %v38 = vld [vmem:[%s1 + $0x4] sm:$0x1]
      %v39 = vld [vmem:[%s1 + $0x5] sm:$0x1]
      %v40 = vld [vmem:[%s1 + $0x6] sm:$0x1]
      %v41 = vld [vmem:[%s1 + $0x7] sm:$0x1]
      %v42 = vunpack.c.0.s8 %v34
      %v43 = vunpack.c.0.s8 %v35
      %v44 = vunpack.c.0.s8 %v36
      %v45 = vunpack.c.0.s8 %v37
      %v46 = vunpack.c.0.s8 %v38
      %v47 = vunpack.c.0.s8 %v39
      %v48 = vunpack.c.0.s8 %v40
      %v49 = vunpack.c.0.s8 %v41
      %vm50 = vcmp.eq.s32.totalorder %v42, 1
      %vm51 = vcmp.eq.s32.totalorder %v43, 1
      %vm52 = vcmp.eq.s32.totalorder %v44, 1
      %vm53 = vcmp.eq.s32.totalorder %v45, 1
      %vm54 = vcmp.eq.s32.totalorder %v46, 1
      %vm55 = vcmp.eq.s32.totalorder %v47, 1
      %vm56 = vcmp.eq.s32.totalorder %v48, 1
      %vm57 = vcmp.eq.s32.totalorder %v49, 1
      %v58 = vsub.f32 1.0, %v30
      %v59 = vsub.f32 1.0, %v31
      %v60 = vsub.f32 1.0, %v32
      %v61 = vsub.f32 1.0, %v33
      %v66 = vcombine.high %v30, %v30
      %v67 = vcombine.high %v31, %v31
      %v68 = vcombine.high %v32, %v32
      %v69 = vcombine.high %v33, %v33
      %v78 = vcombine.high %v58, %v58
      %v79 = vcombine.high %v59, %v59
      %v80 = vcombine.high %v60, %v60
      %v81 = vcombine.high %v61, %v61
      %v86 = vsel %vm50, %v30, %v58
      %v87 = vsel %vm51, %v66, %v78
      %v88 = vsel %vm52, %v31, %v59
      %v89 = vsel %vm53, %v67, %v79
      %v90 = vsel %vm54, %v32, %v60
      %v91 = vsel %vm55, %v68, %v80
      %v92 = vsel %vm56, %v33, %v61
      %v93 = vsel %vm57, %v69, %v81
      %v94 = vsel %vm50, 1.25, 0.75
      %v95 = vsel %vm51, 1.25, 0.75
      %v96 = vsel %vm52, 1.25, 0.75
      %v97 = vsel %vm53, 1.25, 0.75
      %v98 = vsel %vm54, 1.25, 0.75
      %v99 = vsel %vm55, 1.25, 0.75
      %v100 = vsel %vm56, 1.25, 0.75
      %v101 = vsel %vm57, 1.25, 0.75
      %v102 = vlog2.pop %v86
      %v103 = vmul.f32 %v102, 0.6931472
      %v104 = vlog2.pop %v87
      %v105 = vmul.f32 %v104, 0.6931472
      %v106 = vlog2.pop %v88
      %v107 = vmul.f32 %v106, 0.6931472
      %v108 = vlog2.pop %v89
      %v109 = vmul.f32 %v108, 0.6931472
      %v110 = vlog2.pop %v90
      %v111 = vmul.f32 %v110, 0.6931472
      %v112 = vlog2.pop %v91
      %v113 = vmul.f32 %v112, 0.6931472
      %v114 = vlog2.pop %v92
      %v115 = vmul.f32 %v114, 0.6931472
      %v116 = vlog2.pop %v93
      %v117 = vmul.f32 %v116, 0.6931472
      %v118 = vsub.f32 1.0, %v86
      %v119 = vsub.f32 1.0, %v87
      %v120 = vsub.f32 1.0, %v88
      %v121 = vsub.f32 1.0, %v89
      %v122 = vsub.f32 1.0, %v90
      %v123 = vsub.f32 1.0, %v91
      %v124 = vsub.f32 1.0, %v92
      %v125 = vsub.f32 1.0, %v93
      %v126 = vand.u32 2147483647, %v118
      %v127 = vand.u32 2147483647, %v119
      %v128 = vand.u32 2147483647, %v120
      %v129 = vand.u32 2147483647, %v121
      %v130 = vand.u32 2147483647, %v122
      %v131 = vand.u32 2147483647, %v123
      %v132 = vand.u32 2147483647, %v124
      %v133 = vand.u32 2147483647, %v125
      %v134 = vmul.f32 %v126, %v126
      %v135 = vmul.f32 %v127, %v127
      %v136 = vmul.f32 %v128, %v128
      %v137 = vmul.f32 %v129, %v129
      %v138 = vmul.f32 %v130, %v130
      %v139 = vmul.f32 %v131, %v131
      %v140 = vmul.f32 %v132, %v132
      %v141 = vmul.f32 %v133, %v133
      %v142 = vmul.f32 %v103, %v134
      %v143 = vmul.f32 %v105, %v135
      %v144 = vmul.f32 %v107, %v136
      %v145 = vmul.f32 %v109, %v137
      %v146 = vmul.f32 %v111, %v138
      %v147 = vmul.f32 %v113, %v139
      %v148 = vmul.f32 %v115, %v140
      %v149 = vmul.f32 %v117, %v141
      %v150 = vmul.f32 %v142, %v94
      %v151 = vmul.f32 %v143, %v95
      %v152 = vmul.f32 %v144, %v96
      %v153 = vmul.f32 %v145, %v97
      %v154 = vmul.f32 %v146, %v98
      %v155 = vmul.f32 %v147, %v99
      %v156 = vmul.f32 %v148, %v100
      %v157 = vmul.f32 %v149, %v101
      %v166 = vcombine.low %v150, %v151
      %v167 = vcombine.low %v152, %v153
      %v168 = vcombine.low %v154, %v155
      %v169 = vcombine.low %v156, %v157
      %v174 = vadd.f32 %v166, %v167
      %v175 = vadd.f32 %v174, %v168
      %v176 = vadd.f32 %v175, %v169
      %v177 = vadd.f32 %v176, 0.0
      %178 = vst [vmem:[#allocation5] sm:$0xff] %v177
    $region17: #{tpu_custom_call.1} parent=1 // pred_fallthru
      _
    %p179 = scmp.eq.s32.totalorder 0, 0
    // Predicated region
    $region18: #{tpu_custom_call.1} parent=1 // pred_check
      %p180 = pneg %p179
    $region19: #{tpu_custom_call.1} parent=1 // pred_check_branch
      %182 = sbr.rel (%p180) target = $region21
    $region20: #{tpu_custom_call.1} parent=1 // pred_region
      %v183 = vld [vmem:[#allocation2] sm:$0xff]
      %v184 = vld [vmem:[#allocation2 + $0x8] sm:$0xff]
      %v185 = vld [vmem:[#allocation2 + $0x10] sm:$0xff]
      %v186 = vld [vmem:[#allocation2 + $0x18] sm:$0xff]
      %v187 = vld [vmem:[%s1] sm:$0x1]
      %v188 = vld [vmem:[%s1 + $0x1] sm:$0x1]
      %v189 = vld [vmem:[%s1 + $0x2] sm:$0x1]
      %v190 = vld [vmem:[%s1 + $0x3] sm:$0x1]
      %v191 = vld [vmem:[%s1 + $0x4] sm:$0x1]
      %v192 = vld [vmem:[%s1 + $0x5] sm:$0x1]
      %v193 = vld [vmem:[%s1 + $0x6] sm:$0x1]
      %v194 = vld [vmem:[%s1 + $0x7] sm:$0x1]
      %v195 = vunpack.c.0.s8 %v187
      %v196 = vunpack.c.0.s8 %v188
      %v197 = vunpack.c.0.s8 %v189
      %v198 = vunpack.c.0.s8 %v190
      %v199 = vunpack.c.0.s8 %v191
      %v200 = vunpack.c.0.s8 %v192
      %v201 = vunpack.c.0.s8 %v193
      %v202 = vunpack.c.0.s8 %v194
      %vm203 = vcmp.eq.s32.totalorder %v195, 1
      %vm204 = vcmp.eq.s32.totalorder %v196, 1
      %vm205 = vcmp.eq.s32.totalorder %v197, 1
      %vm206 = vcmp.eq.s32.totalorder %v198, 1
      %vm207 = vcmp.eq.s32.totalorder %v199, 1
      %vm208 = vcmp.eq.s32.totalorder %v200, 1
      %vm209 = vcmp.eq.s32.totalorder %v201, 1
      %vm210 = vcmp.eq.s32.totalorder %v202, 1
      %v211 = vsub.f32 1.0, %v183
      %v212 = vsub.f32 1.0, %v184
      %v213 = vsub.f32 1.0, %v185
      %v214 = vsub.f32 1.0, %v186
      %v219 = vcombine.high %v183, %v183
      %v220 = vcombine.high %v184, %v184
      %v221 = vcombine.high %v185, %v185
      %v222 = vcombine.high %v186, %v186
      %v231 = vcombine.high %v211, %v211
      %v232 = vcombine.high %v212, %v212
      %v233 = vcombine.high %v213, %v213
      %v234 = vcombine.high %v214, %v214
      %v239 = vsel %vm203, %v183, %v211
      %v240 = vsel %vm204, %v219, %v231
      %v241 = vsel %vm205, %v184, %v212
      %v242 = vsel %vm206, %v220, %v232
      %v243 = vsel %vm207, %v185, %v213
      %v244 = vsel %vm208, %v221, %v233
      %v245 = vsel %vm209, %v186, %v214
      %v246 = vsel %vm210, %v222, %v234
      %v247 = vsel %vm203, 1.25, 0.75
      %v248 = vsel %vm204, 1.25, 0.75
      %v249 = vsel %vm205, 1.25, 0.75
      %v250 = vsel %vm206, 1.25, 0.75
      %v251 = vsel %vm207, 1.25, 0.75
      %v252 = vsel %vm208, 1.25, 0.75
      %v253 = vsel %vm209, 1.25, 0.75
      %v254 = vsel %vm210, 1.25, 0.75
      %v255 = vlog2.pop %v239
      %v256 = vmul.f32 %v255, 0.6931472
      %v257 = vlog2.pop %v240
      %v258 = vmul.f32 %v257, 0.6931472
      %v259 = vlog2.pop %v241
      %v260 = vmul.f32 %v259, 0.6931472
      %v261 = vlog2.pop %v242
      %v262 = vmul.f32 %v261, 0.6931472
      %v263 = vlog2.pop %v243
      %v264 = vmul.f32 %v263, 0.6931472
      %v265 = vlog2.pop %v244
      %v266 = vmul.f32 %v265, 0.6931472
      %v267 = vlog2.pop %v245
      %v268 = vmul.f32 %v267, 0.6931472
      %v269 = vlog2.pop %v246
      %v270 = vmul.f32 %v269, 0.6931472
      %v271 = vsub.f32 1.0, %v239
      %v272 = vsub.f32 1.0, %v240
      %v273 = vsub.f32 1.0, %v241
      %v274 = vsub.f32 1.0, %v242
      %v275 = vsub.f32 1.0, %v243
      %v276 = vsub.f32 1.0, %v244
      %v277 = vsub.f32 1.0, %v245
      %v278 = vsub.f32 1.0, %v246
      %v279 = vand.u32 2147483647, %v271
      %v280 = vand.u32 2147483647, %v272
      %v281 = vand.u32 2147483647, %v273
      %v282 = vand.u32 2147483647, %v274
      %v283 = vand.u32 2147483647, %v275
      %v284 = vand.u32 2147483647, %v276
      %v285 = vand.u32 2147483647, %v277
      %v286 = vand.u32 2147483647, %v278
      %v287 = vmul.f32 %v279, %v279
      %v288 = vmul.f32 %v280, %v280
      %v289 = vmul.f32 %v281, %v281
      %v290 = vmul.f32 %v282, %v282
      %v291 = vmul.f32 %v283, %v283
      %v292 = vmul.f32 %v284, %v284
      %v293 = vmul.f32 %v285, %v285
      %v294 = vmul.f32 %v286, %v286
      %v295 = vmul.f32 %v256, %v287
      %v296 = vmul.f32 %v258, %v288
      %v297 = vmul.f32 %v260, %v289
      %v298 = vmul.f32 %v262, %v290
      %v299 = vmul.f32 %v264, %v291
      %v300 = vmul.f32 %v266, %v292
      %v301 = vmul.f32 %v268, %v293
      %v302 = vmul.f32 %v270, %v294
      %v303 = vmul.f32 %v295, %v247
      %v304 = vmul.f32 %v296, %v248
      %v305 = vmul.f32 %v297, %v249
      %v306 = vmul.f32 %v298, %v250
      %v307 = vmul.f32 %v299, %v251
      %v308 = vmul.f32 %v300, %v252
      %v309 = vmul.f32 %v301, %v253
      %v310 = vmul.f32 %v302, %v254
      %v311 = vlaneseq
      %v312 = vshrl.u32 %v311, 7
      %v313 = vadd.s32 %v312, 8
      %v314 = vadd.s32 %v312, 16
      %v315 = vadd.s32 %v312, 24
      %v316 = vlaneseq
      %v317 = vand.u32 %v316, 127
      %s318 = smul.u32 0, 32
      %s319 = sadd.s32 %s318, 0
      %v320 = vstv %s319
      %v321 = vadd.s32 %v320, %v312
      %v322 = vadd.s32 %v320, %v313
      %v323 = vadd.s32 %v320, %v314
      %v324 = vadd.s32 %v320, %v315
      %v325 = vmul.u32 %v321, 128
      %v326 = vmul.u32 %v322, 128
      %v327 = vmul.u32 %v323, 128
      %v328 = vmul.u32 %v324, 128
      %v329 = vadd.s32 %v325, %v317
      %v330 = vadd.s32 %v326, %v317
      %v331 = vadd.s32 %v327, %v317
      %v332 = vadd.s32 %v328, %v317
      %vm333 = vcmp.lt.s32.totalorder %v329, 8
      %vm334 = vcmp.lt.s32.totalorder %v330, 8
      %vm335 = vcmp.lt.s32.totalorder %v331, 8
      %vm336 = vcmp.lt.s32.totalorder %v332, 8
      %v345 = vcombine.low %v303, %v304
      %v346 = vcombine.low %v305, %v306
      %v347 = vcombine.low %v307, %v308
      %v348 = vcombine.low %v309, %v310
      %v353 = vsel %vm333, %v345, 0.0
      %v354 = vsel %vm334, %v346, 0.0
      %v355 = vsel %vm335, %v347, 0.0
      %v356 = vsel %vm336, %v348, 0.0
      %v357 = vadd.f32 %v353, %v354
      %v358 = vadd.f32 %v357, %v355
      %v359 = vadd.f32 %v358, %v356
      %v360 = vadd.f32 %v359, 0.0
      %361 = vst [vmem:[#allocation5] sm:$0xff] %v360
    $region21: #{tpu_custom_call.1} parent=1 // pred_fallthru
      _
    // Predicated region
    $region22: #{tpu_custom_call.1} parent=1 // pred_check
      _
    $region23: #{tpu_custom_call.1} parent=1 // pred_check_branch
      %363 = sbr.rel (0) target = $region25
    $region24: #{tpu_custom_call.1} parent=1 // pred_region
      %s365 = ssub.s32 128, 128
      %366 = vsyncadd [#allocation4], %s365
      %s368 = sshll.u32 [#allocation5], 4
      %s369 = int_to_ptr.vmem [resolvable:$true] %s368
      %371 = dma.vmem_to_hbm [thread:$0]  %s369, 128, %s2, [#allocation4]
    $region25: #{tpu_custom_call.1} parent=1 // pred_fallthru
      _
    // Predicated region
    $region26: #{tpu_custom_call.1} parent=1 // pred_check
      _
    $region27: #{tpu_custom_call.1} parent=1 // pred_check_branch
      %373 = sbr.rel (0) target = $region29
    $region28: #{tpu_custom_call.1} parent=1 // pred_region
      %374 = dma.done [#allocation4], 128
    $region29: #{tpu_custom_call.1} parent=1 // pred_fallthru
      _
    %375 = vsyncpa [#allocation3], 1
    %376 = vsyncpa [#allocation4], 1

</llo_original>
